<compile_context>
chip_gen: v7x
topology: tpu7x:2x2x1
jax: 0.10.0
libtpu: 0.0.40
codegen_flags: <defaults>
</compile_context>

<pallas_src>
import math

import jax
import jax.numpy as jnp
import numpy as np
from jax.experimental import pallas as pl
from jax.experimental.pallas import tpu as pltpu

_HALF_LOG_2PI = 0.5 * math.log(2.0 * math.pi)

# Per grid step we stream (in_block + out_block); double-buffered footprint is
# 2x that.  12 MiB per step -> ~24 MiB live, safe on every generation once the
# scoped limit is raised to 48 MiB (v7x physical 64 MiB, v5e/v6e 128 MiB).
_BLOCK_IO_BUDGET = 12 << 20
_VMEM_LIMIT_BYTES = 48 << 20


def _normal_logprob_kernel(p_ref, x_ref, o_ref):
    # p_ref: (3,) f32 in SMEM = [loc, -1/(2*std^2), -log(std) - 0.5*log(2*pi)]
    loc = p_ref[0]
    neg_inv_two_var = p_ref[1]
    const = p_ref[2]
    d = x_ref[...].astype(jnp.float32) - loc
    o_ref[...] = (d * d * neg_inv_two_var + const).astype(o_ref.dtype)


def _sublane_gran(dtype) -> int:
    """Packed sublane granularity: 8 for 4-byte, 16 for 2-byte, 32 for 1-byte."""
    return max(8, 32 // np.dtype(dtype).itemsize)


def _round_up(x: int, m: int) -> int:
    return ((x + m - 1) // m) * m


def _pick_row_tile(rows: int, bytes_per_row: int, gran: int,
                   budget: int = _BLOCK_IO_BUDGET) -> int:
    """Largest gran-aligned row tile within the per-step I/O budget,
    forcing >= 2 grid steps (megacore on v7x) when there is enough work."""
    if rows <= gran:
        return rows  # full-dim block: always layout-legal
    tb = max(gran, (budget // max(1, bytes_per_row)) // gran * gran)
    if tb >= rows:
        tb = _round_up(pl.cdiv(rows, 2), gran)   # split into ~2 even steps
    return min(tb, rows)


class Prior:
    """JAX/Pallas analogue of the PyTorch Prior module.

    forward() returns the Normal prior's parameters (loc, std) together with a
    `log_prob` callable whose elementwise math runs in a Pallas TPU kernel.
    """

    def __init__(self, loc: float = 0.0, std: float = 1.0) -> None:
        # Deterministic "buffers" (module __init__ registers scalar buffers).
        self.loc = jnp.asarray(loc, dtype=jnp.float32)
        self.std = jnp.asarray(std, dtype=jnp.float32)

    def forward(self):
        loc, std = self.loc, self.std

        def log_prob(x: jax.Array) -> jax.Array:
            assert x.ndim == 2, "layout: x is [B, N] (last dim -> 128-lane axis)"
            B, N = x.shape
            out_dtype = x.dtype              # documented: follows x's dtype
            isz_in = np.dtype(x.dtype).itemsize
            isz_out = np.dtype(out_dtype).itemsize
            bpe = isz_in + isz_out
            gran = max(_sublane_gran(x.dtype), _sublane_gran(out_dtype))

            # Hoisted scalar precompute (once per call, outside the kernel).
            loc_f = loc.astype(jnp.float32)
            std_f = std.astype(jnp.float32)
            params = jnp.stack([
                loc_f,
                -1.0 / (2.0 * std_f * std_f),
                -jnp.log(std_f) - jnp.float32(_HALF_LOG_2PI),
            ])

            cost = pl.CostEstimate(flops=4 * B * N, transcendentals=0,
                                   bytes_accessed=B * N * bpe)

            total = B * N
            lane = next((l for l in (1024, 512, 256, 128) if total % l == 0),
                        None)

            if lane is not None:
                # Lane-dense flattened slab: wide unmasked stores, tiling
                # independent of N.
                rows = total // lane
                xf = x.reshape(rows, lane)
                tb = _pick_row_tile(rows, lane * bpe, gran)
                out = pl.pallas_call(
                    _normal_logprob_kernel,
                    out_shape=jax.ShapeDtypeStruct((rows, lane), out_dtype),
                    grid=(pl.cdiv(rows, tb),),
                    in_specs=[
                        pl.BlockSpec(memory_space=pltpu.SMEM),     # (3,) scalars
                        pl.BlockSpec((tb, lane), lambda i: (i, 0)),
                    ],
                    out_specs=pl.BlockSpec((tb, lane), lambda i: (i, 0)),
                    compiler_params=pltpu.CompilerParams(
                        dimension_semantics=("parallel",),
                        vmem_limit_bytes=_VMEM_LIMIT_BYTES),
                    cost_estimate=cost,
                )(params, xf)
                return out.reshape(B, N)

            # Fallback: element count not a multiple of 128 -> tile (B, N)
            # directly on a 2-D grid (both axes independent / parallel).
            if N * gran * bpe <= _BLOCK_IO_BUDGET:
                tn = N
            else:
                tn = max(128, (_BLOCK_IO_BUDGET // (gran * bpe)) // 128 * 128)
            tb = _pick_row_tile(B, tn * bpe, gran)
            return pl.pallas_call(
                _normal_logprob_kernel,
                out_shape=jax.ShapeDtypeStruct((B, N), out_dtype),
                grid=(pl.cdiv(B, tb), pl.cdiv(N, tn)),
                in_specs=[
                    pl.BlockSpec(memory_space=pltpu.SMEM),
                    pl.BlockSpec((tb, tn), lambda i, j: (i, j)),
                ],
                out_specs=pl.BlockSpec((tb, tn), lambda i, j: (i, j)),
                compiler_params=pltpu.CompilerParams(
                    dimension_semantics=("parallel", "parallel"),
                    vmem_limit_bytes=_VMEM_LIMIT_BYTES),
                cost_estimate=cost,
            )(params, x)

        return {"loc": loc, "std": std, "log_prob": log_prob}

    __call__ = forward


def _reference_logprob(x, loc, std):
    xf = np.asarray(x, dtype=np.float32)
    loc = float(loc)
    std = float(std)
    return -((xf - loc) ** 2) / (2.0 * std * std) - math.log(std) - _HALF_LOG_2PI


if __name__ == "__main__":
    key = jax.random.PRNGKey(0)
    prior = Prior(loc=0.0, std=1.0)
    dist = prior()  # forward(): the Normal prior, parameterized by (loc, std)

    # 1) Small f32 case (flattened to a single lane-dense block).
    B, N = 8, 128
    x = jax.random.normal(key, (B, N), dtype=jnp.float32)
    lp = jax.block_until_ready(dist["log_prob"](x))
    np.testing.assert_allclose(
        np.asarray(lp), _reference_logprob(x, dist["loc"], dist["std"]),
        rtol=1e-5, atol=1e-5)

    k2, k3, k4 = jax.random.split(key, 3)

    # 2) Flattened multi-step grid with a masked tail: (20, 96) -> (15, 128),
    #    tb=8 -> 2 grid steps.
    x2 = jax.random.normal(k2, (20, 96), dtype=jnp.float32)
    lp2 = jax.block_until_ready(dist["log_prob"](x2))
    np.testing.assert_allclose(
        np.asarray(lp2), _reference_logprob(x2, dist["loc"], dist["std"]),
        rtol=1e-5, atol=1e-5)

    # 3) Native-bf16 input path (no wrapper cast; bf16 writeback by contract).
    x3 = jax.random.normal(k3, (16, 128), dtype=jnp.bfloat16)
    lp3 = jax.block_until_ready(dist["log_prob"](x3))
    assert lp3.dtype == jnp.bfloat16
    np.testing.assert_allclose(
        np.asarray(lp3, dtype=np.float32),
        _reference_logprob(np.asarray(x3, dtype=np.float32),
                           dist["loc"], dist["std"]),
        rtol=2e-2, atol=3e-2)

    # 4) Fallback 2-D-tiled path (element count not a multiple of 128).
    x4 = jax.random.normal(k4, (20, 100), dtype=jnp.float32)
    lp4 = jax.block_until_ready(dist["log_prob"](x4))
    np.testing.assert_allclose(
        np.asarray(lp4), _reference_logprob(x4, dist["loc"], dist["std"]),
        rtol=1e-5, atol=1e-5)

    print("KERNEL_OK")
</pallas_src>

<mosaic_0001>
module attributes {stable_mosaic.version = 11 : i64} {
  func.func @_normal_logprob_kernel(%arg0: i32, %arg1: memref<3xf32, #tpu.memory_space<smem>>, %arg2: memref<1x1024xf32, #tpu.memory_space<vmem>>, %arg3: memref<1x1024xf32, #tpu.memory_space<vmem>>) attributes {dimension_semantics = [#tpu.dimension_semantics<parallel>], iteration_bounds = array<i64: 1>, scalar_prefetch = 0 : i64, scratch_operands = 0 : i64, tpu.core_type = #tpu.core_type<tc>, window_params = [{transform_indices = @transform_0, window_bounds = array<i64: 3>}, {transform_indices = @transform_1, window_bounds = array<i64: 1, 1024>}, {transform_indices = @transform_2, window_bounds = array<i64: 1, 1024>}]} {
    %c0 = arith.constant 0 : index
    %0 = memref.load %arg1[%c0] : memref<3xf32, #tpu.memory_space<smem>>
    %c1 = arith.constant 1 : index
    %1 = memref.load %arg1[%c1] : memref<3xf32, #tpu.memory_space<smem>>
    %c2 = arith.constant 2 : index
    %2 = memref.load %arg1[%c2] : memref<3xf32, #tpu.memory_space<smem>>
    %c0_0 = arith.constant 0 : index
    %c0_1 = arith.constant 0 : index
    %3 = vector.load %arg2[%c0_0, %c0_1] : memref<1x1024xf32, #tpu.memory_space<vmem>>, vector<1x1024xf32>
    %4 = vector.broadcast %0 : f32 to vector<1x1024xf32>
    %5 = arith.subf %3, %4 : vector<1x1024xf32>
    %6 = arith.mulf %5, %5 : vector<1x1024xf32>
    %7 = vector.broadcast %1 : f32 to vector<1x1024xf32>
    %8 = arith.mulf %6, %7 : vector<1x1024xf32>
    %9 = vector.broadcast %2 : f32 to vector<1x1024xf32>
    %10 = arith.addf %8, %9 : vector<1x1024xf32>
    %c0_2 = arith.constant 0 : index
    %c0_3 = arith.constant 0 : index
    %11 = vector.load %arg3[%c0_2, %c0_3] : memref<1x1024xf32, #tpu.memory_space<vmem>>, vector<1x1024xf32>
    tpu.vector_store %arg3[%c0_2, %c0_3], %10 {strides = array<i32>} : memref<1x1024xf32, #tpu.memory_space<vmem>>, vector<1x1024xf32>,
    return
  }
  func.func @transform_0(%arg0: i32) -> i32 {
    %c0_i32 = arith.constant 0 : i32
    %c0_i32_0 = arith.constant 0 : i32
    return %c0_i32 : i32
  }
  func.func @transform_1(%arg0: i32) -> (i32, i32) {
    %c0_i32 = arith.constant 0 : i32
    %c0_i32_0 = arith.constant 0 : i32
    return %arg0, %c0_i32 : i32, i32
  }
  func.func @transform_2(%arg0: i32) -> (i32, i32) {
    %c0_i32 = arith.constant 0 : i32
    %c0_i32_0 = arith.constant 0 : i32
    return %arg0, %c0_i32 : i32, i32
  }
}

</mosaic_0001>

<llo_original>
// kernel: tpu_custom_call.1
$region0: #{tpu_custom_call.1}
  #allocation0 [shape = 'u32[]', space=smem, size = 0x4, offset = 0x4, fixed_abs, tag = 'smem constant byte address 0x4 - core index']
  #allocation1 [shape = 'u32[144,128]{1,0:T(1,128)}', space=vmem, size = 0x12000, scoped, tag = 'internal scratch']
  %s0 = inlined_call_operand.hbm [shape: f32[3], index: 0, kind: input, shape index: {}]
  %s1 = inlined_call_operand.hbm [shape: f32[1,1024], index: 1, kind: input, shape index: {}]
  %s2 = inlined_call_operand.hbm [shape: f32[1,1024], index: 2, kind: output, shape index: {}]
  %s3 = sld [smem:[#allocation0]]
  $region26: #{tpu_custom_call.1} parent=0
    _
  %s5 = ssub.s32 1, %s3
  %s6 = scalar_select 0, %s5, %s3
  $region1: #{tpu_custom_call.1} parent=0
    #allocation2 [shape = 'u8[512]{0}', space=smem, size = 0x200, scoped, tag = 'input window, operand 0, single buffered']
    #allocation3 [shape = 's32[1]{0}', space=sflag, size = 0x4, scoped, tag = 'scoped memory for tpu_custom_call.1']
    #allocation4 [shape = 's32[1]{0}', space=sflag, size = 0x4, scoped, tag = 'scoped memory for tpu_custom_call.1']
    #allocation5 [shape = 's32[1]{0}', space=sflag, size = 0x4, scoped, tag = 'scoped memory for tpu_custom_call.1']
    #allocation6 [shape = 'u8[4096]{0}', space=vmem, size = 0x1000, scoped, tag = 'input window, operand 1, single buffered']
    #allocation7 [shape = 'u8[4096]{0}', space=vmem, size = 0x1000, scoped, tag = 'output window, operand 0, single buffered']
    %7 = vsyncpa [#allocation5], 0
    %8 = vsyncpa [#allocation3], 0
    %9 = vsyncpa [#allocation4], 0
    // Predicated region
    $region2: #{tpu_custom_call.1} parent=1 // pred_check
      _
    $region3: #{tpu_custom_call.1} parent=1 // pred_check_branch
      %11 = sbr.rel (0) target = $region5
    $region4: #{tpu_custom_call.1} parent=1 // pred_region
      %s13 = ssub.s32 16, 16
      %14 = vsyncadd [#allocation5], %s13
      %17 = dma.hbm_to_smem %s0, 16, [#allocation2], [#allocation5]
    $region5: #{tpu_custom_call.1} parent=1 // pred_fallthru
      _
    // Predicated region
    $region6: #{tpu_custom_call.1} parent=1 // pred_check
      _
    $region7: #{tpu_custom_call.1} parent=1 // pred_check_branch
      %19 = sbr.rel (0) target = $region9
    $region8: #{tpu_custom_call.1} parent=1 // pred_region
      %s21 = ssub.s32 128, 128
      %22 = vsyncadd [#allocation3], %s21
      %s24 = sshll.u32 [#allocation6], 4
      %s25 = int_to_ptr.vmem [resolvable:$true] %s24
      %27 = dma.hbm_to_vmem [thread:$0]  %s1, 128, %s25, [#allocation3]
    $region9: #{tpu_custom_call.1} parent=1 // pred_fallthru
      _
    // Predicated region
    $region10: #{tpu_custom_call.1} parent=1 // pred_check
      _
    $region11: #{tpu_custom_call.1} parent=1 // pred_check_branch
      %29 = sbr.rel (0) target = $region13
    $region12: #{tpu_custom_call.1} parent=1 // pred_region
      %30 = dma.done [#allocation5], 16
    $region13: #{tpu_custom_call.1} parent=1 // pred_fallthru
      _
    // Predicated region
    $region14: #{tpu_custom_call.1} parent=1 // pred_check
      _
    $region15: #{tpu_custom_call.1} parent=1 // pred_check_branch
      %32 = sbr.rel (0) target = $region17
    $region16: #{tpu_custom_call.1} parent=1 // pred_region
      %33 = dma.done [#allocation3], 128
    $region17: #{tpu_custom_call.1} parent=1 // pred_fallthru
      _
    %34 = sfence
    %s35 = sld [smem:[#allocation2]]
    %s36 = sld [smem:[#allocation2 + $0x1]]
    %s37 = sld [smem:[#allocation2 + $0x2]]
    %v38 = vld [vmem:[#allocation6] sm:$0xff]
    %v39 = vstv %s35
    %v40 = vsub.f32 %v38, %v39
    %v41 = vmul.f32 %v40, %v40
    %v42 = vstv %s36
    %v43 = vmul.f32 %v41, %v42
    %v44 = vstv %s37
    %v45 = vadd.f32 %v43, %v44
    %46 = vst [vmem:[#allocation7] sm:$0xff] %v45
    // Predicated region
    $region18: #{tpu_custom_call.1} parent=1 // pred_check
      _
    $region19: #{tpu_custom_call.1} parent=1 // pred_check_branch
      %48 = sbr.rel (0) target = $region21
    $region20: #{tpu_custom_call.1} parent=1 // pred_region
      %s50 = ssub.s32 128, 128
      %51 = vsyncadd [#allocation4], %s50
      %s53 = sshll.u32 [#allocation7], 4
      %s54 = int_to_ptr.vmem [resolvable:$true] %s53
      %56 = dma.vmem_to_hbm [thread:$0]  %s54, 128, %s2, [#allocation4]
    $region21: #{tpu_custom_call.1} parent=1 // pred_fallthru
      _
    // Predicated region
    $region22: #{tpu_custom_call.1} parent=1 // pred_check
      _
    $region23: #{tpu_custom_call.1} parent=1 // pred_check_branch
      %58 = sbr.rel (0) target = $region25
    $region24: #{tpu_custom_call.1} parent=1 // pred_region
      %59 = dma.done [#allocation4], 128
    $region25: #{tpu_custom_call.1} parent=1 // pred_fallthru
      _
    %60 = vsyncpa [#allocation3], 1
    %61 = vsyncpa [#allocation4], 1
    %62 = vsyncpa [#allocation5], 1

</llo_original>
